<compile_context>
chip_gen: v7x
topology: tpu7x:2x2x1
jax: 0.10.0
libtpu: 0.0.40
codegen_flags: <defaults>
</compile_context>

<pallas_src>
import functools

import jax
import jax.numpy as jnp
from jax import lax
from jax.experimental import pallas as pl
from jax.experimental.pallas import tpu as pltpu


def _round_up(x, m):
    return ((x + m - 1) // m) * m


def _choose_tile_n(n, c, itemsize):
    """Largest batch tile (multiple of 8) that fits a conservative VMEM budget."""
    c_pad = _round_up(max(c, 1), 128)            # lanes are padded to 128 in VMEM
    vmem_budget = 8 * 1024 * 1024                # safe on v5e/v6e and v7x (32 MiB scoped)
    max_rows = vmem_budget // (2 * c_pad * max(itemsize, 4))   # 2x: double-buffering
    max_rows = max(8, (max_rows // 8) * 8)
    return max(8, min(1024, max_rows, _round_up(n, 8)))


def _focal_loss_kernel(logits_ref, targets_ref, out_ref, *,
                       alpha, gamma, n_total, tile_n):
    i = pl.program_id(0)

    logits = logits_ref[...].astype(jnp.float32)           # (TN, C)
    tgt = targets_ref[...]                                  # (TN, 1) int32

    # Numerically-stable log-sum-exp over classes.
    m = jnp.max(logits, axis=-1, keepdims=True)             # (TN, 1)
    shifted = logits - m
    lse = jnp.log(jnp.sum(jnp.exp(shifted), axis=-1, keepdims=True)) + m

    # Gather the target-class logit with an iota mask (no dynamic gather on TPU).
    col = lax.broadcasted_iota(jnp.int32, logits.shape, 1)  # (TN, C)
    tgt_logit = jnp.sum(jnp.where(col == tgt, logits, 0.0),
                        axis=-1, keepdims=True)             # (TN, 1)

    ce = lse - tgt_logit                                    # per-sample CE, (TN, 1)
    pt = jnp.exp(-ce)
    one_minus_pt = 1.0 - pt

    # (1 - pt)**gamma: small integer gamma -> repeated multiplies on the 4-wide
    # VPU (free slot) instead of pow == exp(log()) on the single-slot EUP that
    # is already saturated by the log-sum-exp / exp(-ce) above.
    g = float(gamma)
    if g == int(g) and 0 <= int(g) <= 8:
        mod = jnp.ones_like(one_minus_pt)
        for _ in range(int(g)):
            mod = mod * one_minus_pt
    else:
        mod = jnp.power(one_minus_pt, g)

    focal = alpha * mod * ce                                # (TN, 1)

    # Mask padding rows of a ragged last tile (values there may be garbage).
    row = i * tile_n + lax.broadcasted_iota(jnp.int32, (tile_n, 1), 0)
    focal = jnp.where(row < n_total, focal, 0.0)

    out_ref[...] = focal.reshape(1, tile_n, 1)


def focal_loss(logits, targets, *, alpha=1.0, gamma=2.0, reduction="mean",
               tile_n=None):
    n, c = logits.shape
    if tile_n is None:
        tile_n = _choose_tile_n(n, c, jnp.dtype(logits.dtype).itemsize)
    num_tiles = pl.cdiv(n, tile_n)

    targets_2d = targets.astype(jnp.int32).reshape(n, 1)

    kernel = functools.partial(
        _focal_loss_kernel,
        alpha=float(alpha), gamma=float(gamma),
        n_total=n, tile_n=tile_n,
    )

    per_tile = pl.pallas_call(
        kernel,
        out_shape=jax.ShapeDtypeStruct((num_tiles, tile_n, 1), jnp.float32),
        grid_spec=pltpu.PrefetchScalarGridSpec(
            num_scalar_prefetch=0,
            grid=(num_tiles,),
            in_specs=[
                pl.BlockSpec((tile_n, c), lambda i: (i, 0)),
                pl.BlockSpec((tile_n, 1), lambda i: (i, 0)),
            ],
            out_specs=pl.BlockSpec((1, tile_n, 1), lambda i: (i, 0, 0)),
        ),
        compiler_params=pltpu.CompilerParams(
            dimension_semantics=("parallel",)),   # independent tiles -> megacore on v7x
    )(logits, targets_2d)

    per_sample = per_tile.reshape(num_tiles * tile_n)[:n]
    if reduction == "mean":
        return jnp.sum(per_sample) / n
    elif reduction == "sum":
        return jnp.sum(per_sample)
    else:  # 'none'
        return per_sample


def _focal_loss_ref(logits, targets, alpha=1.0, gamma=2.0, reduction="mean"):
    # Pure-JAX reference mirroring torch.nn.functional.cross_entropy + focal term.
    logp = jax.nn.log_softmax(logits.astype(jnp.float32), axis=-1)
    ce = -jnp.take_along_axis(logp, targets[:, None].astype(jnp.int32), axis=-1)[:, 0]
    pt = jnp.exp(-ce)
    fl = alpha * (1.0 - pt) ** gamma * ce
    if reduction == "mean":
        return jnp.mean(fl)
    if reduction == "sum":
        return jnp.sum(fl)
    return fl


if __name__ == "__main__":
    key = jax.random.PRNGKey(0)
    k1, k2, k3, k4 = jax.random.split(key, 4)

    # Case 1: small aligned batch, reduction='mean' (matches the torch default).
    N, C = 16, 32
    logits = jax.random.normal(k1, (N, C), dtype=jnp.float32) * 2.0
    targets = jax.random.randint(k2, (N,), 0, C, dtype=jnp.int32)

    out = jax.block_until_ready(
        focal_loss(logits, targets, alpha=1.0, gamma=2.0, reduction="mean"))
    ref = _focal_loss_ref(logits, targets, alpha=1.0, gamma=2.0, reduction="mean")
    assert jnp.allclose(out, ref, rtol=1e-5, atol=1e-5), (out, ref)

    # Case 2: ragged batch (not a multiple of the tile), 'none' and 'sum'.
    N2, C2 = 13, 32
    logits2 = jax.random.normal(k3, (N2, C2), dtype=jnp.float32) * 2.0
    targets2 = jax.random.randint(k4, (N2,), 0, C2, dtype=jnp.int32)

    out_none = jax.block_until_ready(
        focal_loss(logits2, targets2, alpha=0.5, gamma=2.0, reduction="none"))
    ref_none = _focal_loss_ref(logits2, targets2, alpha=0.5, gamma=2.0,
                               reduction="none")
    assert out_none.shape == (N2,)
    assert jnp.allclose(out_none, ref_none, rtol=1e-5, atol=1e-5), (out_none, ref_none)

    out_sum = jax.block_until_ready(
        focal_loss(logits2, targets2, alpha=0.5, gamma=2.0, reduction="sum"))
    ref_sum = _focal_loss_ref(logits2, targets2, alpha=0.5, gamma=2.0,
                              reduction="sum")
    assert jnp.allclose(out_sum, ref_sum, rtol=1e-5, atol=1e-5), (out_sum, ref_sum)

    print("KERNEL_OK")
</pallas_src>

<mosaic_0001>
module attributes {stable_mosaic.version = 11 : i64} {
  func.func @_focal_loss_kernel(%arg0: i32, %arg1: memref<16x32xf32, #tpu.memory_space<vmem>>, %arg2: memref<16x1xi32, #tpu.memory_space<vmem>>, %arg3: memref<1x16x1xf32, #tpu.memory_space<vmem>>) attributes {dimension_semantics = [#tpu.dimension_semantics<parallel>], iteration_bounds = array<i64: 1>, scalar_prefetch = 0 : i64, scratch_operands = 0 : i64, tpu.core_type = #tpu.core_type<tc>, window_params = [{transform_indices = @transform_0, window_bounds = array<i64: 16, 32>}, {transform_indices = @transform_1, window_bounds = array<i64: 16, 1>}, {transform_indices = @transform_2, window_bounds = array<i64: 1, 16, 1>}]} {
    %c0 = arith.constant 0 : index
    %c0_0 = arith.constant 0 : index
    %0 = vector.load %arg1[%c0, %c0_0] : memref<16x32xf32, #tpu.memory_space<vmem>>, vector<16x32xf32>
    %c0_1 = arith.constant 0 : index
    %c0_2 = arith.constant 0 : index
    %1 = vector.load %arg2[%c0_1, %c0_2] : memref<16x1xi32, #tpu.memory_space<vmem>>, vector<16x1xi32>
    %cst = arith.constant dense<0xFF800000> : vector<16xf32>
    %2 = vector.multi_reduction <maximumf>, %0, %cst [1] : vector<16x32xf32> to vector<16xf32>
    %3 = vector.shape_cast %2 : vector<16xf32> to vector<16x1xf32>
    %4 = vector.broadcast %3 : vector<16x1xf32> to vector<16x32xf32>
    %5 = arith.subf %0, %4 : vector<16x32xf32>
    %6 = math.exp %5 : vector<16x32xf32>
    %cst_3 = arith.constant dense<0.000000e+00> : vector<16xf32>
    %7 = vector.multi_reduction <add>, %6, %cst_3 [1] : vector<16x32xf32> to vector<16xf32>
    %8 = vector.shape_cast %7 : vector<16xf32> to vector<16x1xf32>
    %9 = math.log %8 : vector<16x1xf32>
    %10 = arith.addf %9, %3 : vector<16x1xf32>
    %11 = tpu.iota {dimensions = array<i32: 1>} : vector<16x32xi32>
    %12 = vector.broadcast %1 : vector<16x1xi32> to vector<16x32xi32>
    %13 = arith.cmpi eq, %11, %12 : vector<16x32xi32>
    %cst_4 = arith.constant 0.000000e+00 : f32
    %14 = vector.broadcast %cst_4 : f32 to vector<16x32xf32>
    %15 = arith.select %13, %0, %14 : vector<16x32xi1>, vector<16x32xf32>
    %cst_5 = arith.constant dense<0.000000e+00> : vector<16xf32>
    %16 = vector.multi_reduction <add>, %15, %cst_5 [1] : vector<16x32xf32> to vector<16xf32>
    %17 = vector.shape_cast %16 : vector<16xf32> to vector<16x1xf32>
    %18 = arith.subf %10, %17 : vector<16x1xf32>
    %cst_6 = arith.constant 0.000000e+00 : f32
    %19 = vector.broadcast %cst_6 : f32 to vector<16x1xf32>
    %20 = arith.subf %19, %18 : vector<16x1xf32>
    %21 = math.exp %20 : vector<16x1xf32>
    %cst_7 = arith.constant 1.000000e+00 : f32
    %22 = vector.broadcast %cst_7 : f32 to vector<16x1xf32>
    %23 = arith.subf %22, %21 : vector<16x1xf32>
    %cst_8 = arith.constant 1.000000e+00 : f32
    %24 = vector.broadcast %cst_8 : f32 to vector<16x1xf32>
    %25 = arith.mulf %24, %23 : vector<16x1xf32>
    %26 = arith.mulf %25, %23 : vector<16x1xf32>
    %cst_9 = arith.constant 1.000000e+00 : f32
    %27 = vector.broadcast %cst_9 : f32 to vector<16x1xf32>
    %28 = arith.mulf %27, %26 : vector<16x1xf32>
    %29 = arith.mulf %28, %18 : vector<16x1xf32>
    %c16_i32 = arith.constant 16 : i32
    %30 = arith.muli %arg0, %c16_i32 : i32
    %31 = tpu.iota {dimensions = array<i32: 0>} : vector<16x1xi32>
    %32 = vector.broadcast %30 : i32 to vector<16x1xi32>
    %33 = arith.addi %32, %31 : vector<16x1xi32>
    %c16_i32_10 = arith.constant 16 : i32
    %34 = vector.broadcast %c16_i32_10 : i32 to vector<16x1xi32>
    %35 = arith.cmpi slt, %33, %34 : vector<16x1xi32>
    %cst_11 = arith.constant 0.000000e+00 : f32
    %36 = vector.broadcast %cst_11 : f32 to vector<16x1xf32>
    %37 = arith.select %35, %29, %36 : vector<16x1xi1>, vector<16x1xf32>
    %38 = vector.shape_cast %37 : vector<16x1xf32> to vector<1x16x1xf32>
    %c0_12 = arith.constant 0 : index
    %c0_13 = arith.constant 0 : index
    %c0_14 = arith.constant 0 : index
    %39 = vector.load %arg3[%c0_12, %c0_13, %c0_14] : memref<1x16x1xf32, #tpu.memory_space<vmem>>, vector<1x16x1xf32>
    tpu.vector_store %arg3[%c0_12, %c0_13, %c0_14], %38 {strides = array<i32>} : memref<1x16x1xf32, #tpu.memory_space<vmem>>, vector<1x16x1xf32>,
    return
  }
  func.func @transform_0(%arg0: i32) -> (i32, i32) {
    %c0_i32 = arith.constant 0 : i32
    %c0_i32_0 = arith.constant 0 : i32
    return %arg0, %c0_i32 : i32, i32
  }
  func.func @transform_1(%arg0: i32) -> (i32, i32) {
    %c0_i32 = arith.constant 0 : i32
    %c0_i32_0 = arith.constant 0 : i32
    return %arg0, %c0_i32 : i32, i32
  }
  func.func @transform_2(%arg0: i32) -> (i32, i32, i32) {
    %c0_i32 = arith.constant 0 : i32
    %c0_i32_0 = arith.constant 0 : i32
    %c0_i32_1 = arith.constant 0 : i32
    return %arg0, %c0_i32, %c0_i32_0 : i32, i32, i32
  }
}

</mosaic_0001>

<llo_original>
// kernel: tpu_custom_call.1
$region0: #{tpu_custom_call.1}
  #allocation0 [shape = 'u32[]', space=smem, size = 0x4, offset = 0x4, fixed_abs, tag = 'smem constant byte address 0x4 - core index']
  #allocation1 [shape = 'u32[144,128]{1,0:T(1,128)}', space=vmem, size = 0x12000, scoped, tag = 'internal scratch']
  %s0 = inlined_call_operand.vmem [shape: f32[16,32], index: 0, kind: input, shape index: {}]
  %s1 = inlined_call_operand.vmem [shape: s32[16,1], index: 1, kind: input, shape index: {}]
  %s2 = inlined_call_operand.vmem [shape: f32[1,16,1], index: 2, kind: output, shape index: {}]
  %s3 = sld [smem:[#allocation0]]
  $region18: #{tpu_custom_call.1} parent=0
    _
  %s5 = ssub.s32 1, %s3
  %s6 = scalar_select 0, %s5, %s3
  // Predicated region
  $region2: #{tpu_custom_call.1} parent=0 // pred_check
    _
  $region3: #{tpu_custom_call.1} parent=0 // pred_check_branch
    %8 = sbr.rel (0) target = $region5
  $region4: #{tpu_custom_call.1} parent=0 // pred_region
    _
  $region5: #{tpu_custom_call.1} parent=0 // pred_fallthru
    _
  // Predicated region
  $region6: #{tpu_custom_call.1} parent=0 // pred_check
    _
  $region7: #{tpu_custom_call.1} parent=0 // pred_check_branch
    %10 = sbr.rel (0) target = $region9
  $region8: #{tpu_custom_call.1} parent=0 // pred_region
    _
  $region9: #{tpu_custom_call.1} parent=0 // pred_fallthru
    _
  %v11 = vld [vmem:[%s0] sm:$0xff]
  %v12 = vld [vmem:[%s0 + $0x8] sm:$0xff]
  %v13 = vld [vmem:[%s1] sm:$0xff]
  %v14 = vld [vmem:[%s1 + $0x8] sm:$0xff]
  %vm15 = vcmask 261120
  %v16 = vsel %vm15, %v11, -inf
  %17 = vmax.xlane.f32.xlu0 %v16
  %v18 = vpop.xlane.xlu0 %17
  %v19 = vsel %vm15, %v12, -inf
  %20 = vmax.xlane.f32.xlu0 %v19
  %v21 = vpop.xlane.xlu0 %20
  %v22 = vsub.f32 %v11, %v18
  %v23 = vsub.f32 %v12, %v21
  %v24 = vmul.f32 %v22, 1.442695
  %v25 = vpow.pop %v24
  %v26 = vmul.f32 %v23, 1.442695
  %v27 = vpow.pop %v26
  %v28 = vsel %vm15, %v25, 0.0
  %29 = vadd.xlane.f32.xlu0 %v28
  %v30 = vpop.xlane.xlu0 %29
  %v31 = vsel %vm15, %v27, 0.0
  %32 = vadd.xlane.f32.xlu0 %v31
  %v33 = vpop.xlane.xlu0 %32
  %v34 = vlog2.pop %v30
  %v35 = vmul.f32 %v34, 0.6931472
  %v36 = vlog2.pop %v33
  %v37 = vmul.f32 %v36, 0.6931472
  %v38 = vadd.f32 %v35, %v18
  %v39 = vadd.f32 %v37, %v21
  %v40 = vlaneseq
  %v41 = vand.u32 %v40, 127
  %42 = vset.pattern.permute.xlu0 0
  %43 = vperm.xlu0 %42, %v13
  %v44 = vpop.permute.xlu0 %43
  %45 = vset.pattern.permute.xlu0 0
  %46 = vperm.xlu0 %45, %v14
  %v47 = vpop.permute.xlu0 %46
  %vm48 = vcmp.eq.s32.totalorder %v41, %v44
  %vm49 = vcmp.eq.s32.totalorder %v41, %v47
  %v50 = vsel %vm48, %v11, 0.0
  %v51 = vsel %vm49, %v12, 0.0
  %v52 = vsel %vm15, %v50, 0.0
  %53 = vadd.xlane.f32.xlu0 %v52
  %v54 = vpop.xlane.xlu0 %53
  %v55 = vsel %vm15, %v51, 0.0
  %56 = vadd.xlane.f32.xlu0 %v55
  %v57 = vpop.xlane.xlu0 %56
  %v58 = vsub.f32 %v38, %v54
  %v59 = vsub.f32 %v39, %v57
  %v60 = vsub.f32 0.0, %v58
  %v61 = vsub.f32 0.0, %v59
  %v62 = vmul.f32 %v60, 1.442695
  %v63 = vpow.pop %v62
  %v64 = vmul.f32 %v61, 1.442695
  %v65 = vpow.pop %v64
  %v66 = vsub.f32 1.0, %v63
  %v67 = vsub.f32 1.0, %v65
  %v68 = vmul.f32 %v66, %v66
  %v69 = vmul.f32 %v67, %v67
  %v70 = vmul.f32 %v68, %v58
  %v71 = vmul.f32 %v69, %v59
  %s72 = smul.u32 0, 16
  %v73 = vlaneseq
  %v74 = vshrl.u32 %v73, 7
  %v75 = vadd.s32 %v74, 8
  %v76 = vstv %s72
  %v77 = vadd.s32 %v76, %v74
  %v78 = vadd.s32 %v76, %v75
  %vm79 = vcmp.lt.s32.totalorder %v77, 16
  %vm80 = vcmp.lt.s32.totalorder %v78, 16
  %v81 = vsel %vm79, %v70, 0.0
  %v82 = vsel %vm80, %v71, 0.0
  %vm83 = vcmask 7168
  %84 = vst.msk [vmem:[%s2] sm:$0xff] %vm83, %v81
  %85 = vst.msk [vmem:[%s2 + $0x8] sm:$0xff] %vm83, %v82
  // Predicated region
  $region10: #{tpu_custom_call.1} parent=0 // pred_check
    _
  $region11: #{tpu_custom_call.1} parent=0 // pred_check_branch
    %87 = sbr.rel (0) target = $region13
  $region12: #{tpu_custom_call.1} parent=0 // pred_region
    _
  $region13: #{tpu_custom_call.1} parent=0 // pred_fallthru
    _
  // Predicated region
  $region14: #{tpu_custom_call.1} parent=0 // pred_check
    _
  $region15: #{tpu_custom_call.1} parent=0 // pred_check_branch
    %89 = sbr.rel (0) target = $region17
  $region16: #{tpu_custom_call.1} parent=0 // pred_region
    _
  $region17: #{tpu_custom_call.1} parent=0 // pred_fallthru
    _

</llo_original>
